<compile_context>
chip_gen: v5e
topology: v5e:2x2
jax: 0.10.0
libtpu: 0.0.40
codegen_flags: <defaults>
</compile_context>

<pallas_src>
import functools

import jax
import jax.numpy as jnp
from jax.experimental import pallas as pl
from jax.experimental.pallas import tpu as pltpu

LANE = 128  # TPU lane width: feature dims padded to multiples of this.


def _round_up(x, m):
    return ((x + m - 1) // m) * m


# ---------------------------------------------------------------------------
# Kernel 1: feature transform  Y = D^{-1/2} (X @ W)   (row-tiled, bf16 streams)
# ---------------------------------------------------------------------------
def feature_transform_kernel(x_ref, w_ref, dinv_ref, o_ref):
    xw = jnp.dot(x_ref[...], w_ref[...], preferred_element_type=jnp.float32)
    o_ref[...] = (xw * dinv_ref[...]).astype(o_ref.dtype)


def feature_transform(x, w, dinv, *, tm):
    n_pad, f_in_p = x.shape
    f_out_p = w.shape[1]
    return pl.pallas_call(
        feature_transform_kernel,
        out_shape=jax.ShapeDtypeStruct((n_pad, f_out_p), jnp.bfloat16),
        grid_spec=pltpu.PrefetchScalarGridSpec(
            num_scalar_prefetch=0,
            grid=(n_pad // tm,),
            in_specs=[
                pl.BlockSpec((tm, f_in_p), lambda i: (i, 0)),
                pl.BlockSpec((f_in_p, f_out_p), lambda i: (0, 0)),
                pl.BlockSpec((tm, 1), lambda i: (i, 0)),
            ],
            out_specs=pl.BlockSpec((tm, f_out_p), lambda i: (i, 0)),
        ),
        compiler_params=pltpu.CompilerParams(
            dimension_semantics=("parallel",),
            vmem_limit_bytes=32 * 1024 * 1024,
        ),
    )(x, w, dinv)


# ---------------------------------------------------------------------------
# Kernel 2: aggregation  H = D^{-1/2} (A+I) Y + b  (+ fused relu@W2 or log_softmax)
# grid = (row tiles, k tiles); k last, "arbitrary"; f32 VMEM accumulator.
# A streamed as int8 (binary, exact); XW (Y) VMEM-resident across the grid.
# ---------------------------------------------------------------------------
def gcn_aggregate_kernel(*refs, fuse_w2, apply_log_softmax, valid_cols,
                         resident_xw, tk):
    if fuse_w2:
        a_ref, y_ref, dinv_ref, b_ref, w2_ref, o_ref, acc_ref = refs
    else:
        a_ref, y_ref, dinv_ref, b_ref, o_ref, acc_ref = refs
        w2_ref = None

    k = pl.program_id(1)

    @pl.when(k == 0)
    def _():
        acc_ref[...] = jnp.zeros_like(acc_ref)

    # Binary adjacency tile streamed as int8 (half the HBM bytes of bf16, values
    # exact); the VPU cast to bf16 is hidden under the DMA (kernel is mem-bound).
    a_tile = a_ref[...].astype(jnp.bfloat16)
    if resident_xw:
        start = pl.multiple_of(k * tk, tk)
        y_tile = y_ref[pl.ds(start, tk), :]
    else:
        y_tile = y_ref[...]
    acc_ref[...] += jnp.dot(a_tile, y_tile, preferred_element_type=jnp.float32)

    @pl.when(k == pl.num_programs(1) - 1)
    def _():
        dinv = dinv_ref[...]                       # (tm, 1) f32
        h = acc_ref[...] * dinv + b_ref[...]       # bias AFTER the dinv row scale
        if fuse_w2:
            # Fused layer-2 feature transform: y2 = D^{-1/2} (relu(h) @ W2)
            h = jnp.maximum(h, 0.0)
            # TODO(synk): training-mode dropout(p=0.5) omitted — identity in eval mode.
            h = jnp.dot(h.astype(jnp.bfloat16), w2_ref[...],
                        preferred_element_type=jnp.float32) * dinv
        if apply_log_softmax:
            # Mask padded feature lanes so they don't corrupt the normalizer.
            col = jax.lax.broadcasted_iota(jnp.int32, h.shape, 1)
            h = jnp.where(col < valid_cols, h, -jnp.inf)
            m = jnp.max(h, axis=1, keepdims=True)
            s = h - m
            h = s - jnp.log(jnp.sum(jnp.exp(s), axis=1, keepdims=True))
        o_ref[...] = h.astype(o_ref.dtype)


def gcn_aggregate(a_bin, y, dinv, b, w2, *, apply_log_softmax, valid_cols,
                  out_dtype, tm, tk):
    n_pad, f_in_p = y.shape
    f_out_p = w2.shape[1] if w2 is not None else f_in_p
    fuse_w2 = w2 is not None

    # Keep the resident XW copy (double-buffered) under ~24 MiB; beyond that,
    # fall back to streaming it per k tile.
    resident_xw = (2 * n_pad * f_in_p * 2) <= 24 * 1024 * 1024

    in_specs = [
        pl.BlockSpec((tm, tk), lambda i, k: (i, k)),                 # A (int8)
        (pl.BlockSpec((n_pad, f_in_p), lambda i, k: (0, 0)) if resident_xw
         else pl.BlockSpec((tk, f_in_p), lambda i, k: (k, 0))),      # Y
        pl.BlockSpec((tm, 1), lambda i, k: (i, 0)),                  # dinv (f32)
        pl.BlockSpec((1, f_in_p), lambda i, k: (0, 0)),              # bias (f32)
    ]
    args = [a_bin, y, dinv, b]
    if fuse_w2:
        in_specs.append(pl.BlockSpec(w2.shape, lambda i, k: (0, 0)))  # W2 (bf16)
        args.append(w2)

    kernel = functools.partial(
        gcn_aggregate_kernel,
        fuse_w2=fuse_w2,
        apply_log_softmax=apply_log_softmax,
        valid_cols=valid_cols,
        resident_xw=resident_xw,
        tk=tk,
    )
    return pl.pallas_call(
        kernel,
        out_shape=jax.ShapeDtypeStruct((n_pad, f_out_p), out_dtype),
        grid_spec=pltpu.PrefetchScalarGridSpec(
            num_scalar_prefetch=0,
            grid=(n_pad // tm, n_pad // tk),
            in_specs=in_specs,
            out_specs=pl.BlockSpec((tm, f_out_p), lambda i, k: (i, 0)),
            scratch_shapes=[pltpu.VMEM((tm, f_in_p), jnp.float32)],
        ),
        compiler_params=pltpu.CompilerParams(
            dimension_semantics=("parallel", "arbitrary"),
            # 48 MiB: leaves headroom on v7x (64 MiB/TC) and is far under v5e/v6e.
            vmem_limit_bytes=48 * 1024 * 1024,
        ),
    )(*args)


# ---------------------------------------------------------------------------
# Plain-JAX glue: binary (A + I) as padded int8 + D^{-1/2} column vector.
# No dense f32 A_hat is materialized (normalization lives in the kernels).
# ---------------------------------------------------------------------------
def build_normalized_graph(edge_index, n, n_pad):
    a = jnp.zeros((n_pad, n_pad), jnp.int8)
    a = a.at[edge_index[1], edge_index[0]].set(1)   # message src -> dst
    idx = jnp.arange(n)
    a = a.at[idx, idx].set(1)                        # self loops on real nodes only
    # TODO(synk): duplicate edges are deduped here; PyG's gcn_norm scatter-adds them.
    deg = jnp.sum(a, axis=1, dtype=jnp.int32).astype(jnp.float32)
    dinv = jnp.where(deg > 0, jax.lax.rsqrt(deg), 0.0)
    return a, dinv.reshape(n_pad, 1)
    # TODO(synk): dense (N,N) adjacency is the scaling ceiling; a block-sparse
    #             scalar-prefetch formulation would be the long-term replacement.


def pyg_gcn_forward(x, edge_index, params):
    """Eval-mode forward of PYG_GCN (num_layers=2)."""
    n, f_in = x.shape
    (w1, b1), (w2, b2) = params
    hid = w1.shape[1]
    out_c = w2.shape[1]

    # Tile sizing: tm=512 only when the row axis keeps >=2 tiles (v7x megacore
    # sharding); tk = largest 256-multiple (<=2048) dividing n_pad, bounding the
    # in-kernel int8->bf16 cast temp; feature transform uses bigger row tiles.
    tm = 512 if n >= 1024 else 256
    n_pad = _round_up(n, tm)
    tk = max(t for t in (2048, 1024, 512, 256) if n_pad % t == 0)
    tm_ft = max(t for t in (1024, 512, 256) if n_pad % t == 0)

    f_in_p = _round_up(f_in, LANE)
    hid_p = _round_up(hid, LANE)
    out_p = _round_up(out_c, LANE)

    a_bin, dinv = build_normalized_graph(edge_index, n, n_pad)

    x_p = jnp.pad(x, ((0, n_pad - n), (0, f_in_p - f_in))).astype(jnp.bfloat16)
    w1_p = jnp.pad(w1, ((0, f_in_p - f_in), (0, hid_p - hid))).astype(jnp.bfloat16)
    b1_p = jnp.pad(b1, (0, hid_p - hid)).reshape(1, hid_p).astype(jnp.float32)
    w2_p = jnp.pad(w2, ((0, hid_p - hid), (0, out_p - out_c))).astype(jnp.bfloat16)
    b2_p = jnp.pad(b2, (0, out_p - out_c)).reshape(1, out_p).astype(jnp.float32)

    # Layer 1 transform: Y1 = D^{-1/2} (X @ W1)
    y1 = feature_transform(x_p, w1_p, dinv, tm=tm_ft)

    # Layer 1 aggregate with fused layer-2 transform:
    #   Y2 = D^{-1/2} ( relu( D^{-1/2} (A+I) Y1 + b1 ) @ W2 )
    y2 = gcn_aggregate(a_bin, y1, dinv, b1_p, w2_p,
                       apply_log_softmax=False, valid_cols=hid_p,
                       out_dtype=jnp.bfloat16, tm=tm, tk=tk)

    # Layer 2 aggregate + bias + masked log_softmax (f32 out)
    out = gcn_aggregate(a_bin, y2, dinv, b2_p, None,
                        apply_log_softmax=True, valid_cols=out_c,
                        out_dtype=jnp.float32, tm=tm, tk=tk)

    return out[:n, :out_c]


def reference_forward(x, edge_index, params):
    """Pure-JAX f32 reference for correctness checking."""
    n = x.shape[0]
    a = jnp.zeros((n, n), jnp.float32).at[edge_index[1], edge_index[0]].set(1.0)
    a = jnp.maximum(a, jnp.eye(n, dtype=jnp.float32))
    deg = jnp.sum(a, axis=1)
    dinv = jnp.where(deg > 0, 1.0 / jnp.sqrt(deg), 0.0)
    a_hat = dinv[:, None] * a * dinv[None, :]
    (w1, b1), (w2, b2) = params
    h = jnp.maximum(a_hat @ (x @ w1) + b1, 0.0)
    o = a_hat @ (h @ w2) + b2
    return jax.nn.log_softmax(o, axis=1)


if __name__ == "__main__":
    # Small deterministic setup consistent with the module:
    # in_channels=16, hidden_channels=32, out_channels=8, num_layers=2, N=32 nodes.
    N, IN_C, HID_C, OUT_C = 32, 16, 32, 8
    NUM_EDGES = 64

    key = jax.random.PRNGKey(0)
    kx, ks, kd, kw1, kb1, kw2, kb2 = jax.random.split(key, 7)

    x = jax.random.normal(kx, (N, IN_C), dtype=jnp.float32)

    src = jax.random.randint(ks, (NUM_EDGES,), 0, N)
    dst = jax.random.randint(kd, (NUM_EDGES,), 0, N)
    # symmetric (undirected) edge set, as typical for GCN benchmarks
    edge_index = jnp.stack(
        [jnp.concatenate([src, dst]), jnp.concatenate([dst, src])], axis=0
    ).astype(jnp.int32)

    # Deterministic glorot-ish weight init, zero bias (GCNConv default bias init).
    def glorot(k, fan_in, fan_out):
        lim = jnp.sqrt(6.0 / (fan_in + fan_out))
        return jax.random.uniform(k, (fan_in, fan_out), jnp.float32, -lim, lim)

    params = (
        (glorot(kw1, IN_C, HID_C), jnp.zeros((HID_C,), jnp.float32)),
        (glorot(kw2, HID_C, OUT_C), jnp.zeros((OUT_C,), jnp.float32)),
    )

    out = pyg_gcn_forward(x, edge_index, params)
    out = jax.block_until_ready(out)

    assert out.shape == (N, OUT_C), out.shape
    # log_softmax rows should sum (in prob space) to ~1
    assert jnp.allclose(jnp.sum(jnp.exp(out), axis=1), 1.0, atol=1e-4)
    # compare against a pure-JAX f32 reference (tol covers bf16 feature streams)
    ref = reference_forward(x, edge_index, params)
    assert jnp.allclose(out, ref, atol=2e-1), float(jnp.max(jnp.abs(out - ref)))
    print("KERNEL_OK")
</pallas_src>

<mosaic_0001>
module attributes {stable_mosaic.version = 11 : i64} {
  func.func @feature_transform_kernel(%arg0: i32, %arg1: memref<256x128xbf16, #tpu.memory_space<vmem>>, %arg2: memref<128x128xbf16, #tpu.memory_space<vmem>>, %arg3: memref<256x1xf32, #tpu.memory_space<vmem>>, %arg4: memref<256x128xbf16, #tpu.memory_space<vmem>>) attributes {dimension_semantics = [#tpu.dimension_semantics<parallel>], iteration_bounds = array<i64: 1>, scalar_prefetch = 0 : i64, scratch_operands = 0 : i64, tpu.core_type = #tpu.core_type<tc>, window_params = [{transform_indices = @transform_0, window_bounds = array<i64: 256, 128>}, {pipeline_mode = #tpu.pipeline_mode<synchronous>, transform_indices = @transform_1, window_bounds = array<i64: 128, 128>}, {transform_indices = @transform_2, window_bounds = array<i64: 256, 1>}, {transform_indices = @transform_3, window_bounds = array<i64: 256, 128>}]} {
    %c0 = arith.constant 0 : index
    %c0_0 = arith.constant 0 : index
    %0 = vector.load %arg1[%c0, %c0_0] : memref<256x128xbf16, #tpu.memory_space<vmem>>, vector<256x128xbf16>
    %c0_1 = arith.constant 0 : index
    %c0_2 = arith.constant 0 : index
    %1 = vector.load %arg2[%c0_1, %c0_2] : memref<128x128xbf16, #tpu.memory_space<vmem>>, vector<128x128xbf16>
    %cst = arith.constant dense<0.000000e+00> : vector<256x128xf32>
    %2 = tpu.matmul %0, %1, %cst {dimension_numbers = #tpu.dot_dimension_numbers<[1], [0], [0], [1], [0, 0, 1, 1], [], []>} : vector<256x128xbf16>, vector<128x128xbf16>, vector<256x128xf32> -> vector<256x128xf32>
    %c0_3 = arith.constant 0 : index
    %c0_4 = arith.constant 0 : index
    %3 = vector.load %arg3[%c0_3, %c0_4] : memref<256x1xf32, #tpu.memory_space<vmem>>, vector<256x1xf32>
    %4 = vector.broadcast %3 : vector<256x1xf32> to vector<256x128xf32>
    %5 = arith.mulf %2, %4 : vector<256x128xf32>
    %6 = arith.truncf %5 : vector<256x128xf32> to vector<256x128xbf16>
    %c0_5 = arith.constant 0 : index
    %c0_6 = arith.constant 0 : index
    %7 = vector.load %arg4[%c0_5, %c0_6] : memref<256x128xbf16, #tpu.memory_space<vmem>>, vector<256x128xbf16>
    tpu.vector_store %arg4[%c0_5, %c0_6], %6 {strides = array<i32>} : memref<256x128xbf16, #tpu.memory_space<vmem>>, vector<256x128xbf16>,
    return
  }
  func.func @transform_0(%arg0: i32) -> (i32, i32) {
    %c0_i32 = arith.constant 0 : i32
    %c0_i32_0 = arith.constant 0 : i32
    return %arg0, %c0_i32 : i32, i32
  }
  func.func @transform_1(%arg0: i32) -> (i32, i32) {
    %c0_i32 = arith.constant 0 : i32
    %c0_i32_0 = arith.constant 0 : i32
    %c0_i32_1 = arith.constant 0 : i32
    return %c0_i32, %c0_i32_0 : i32, i32
  }
  func.func @transform_2(%arg0: i32) -> (i32, i32) {
    %c0_i32 = arith.constant 0 : i32
    %c0_i32_0 = arith.constant 0 : i32
    return %arg0, %c0_i32 : i32, i32
  }
  func.func @transform_3(%arg0: i32) -> (i32, i32) {
    %c0_i32 = arith.constant 0 : i32
    %c0_i32_0 = arith.constant 0 : i32
    return %arg0, %c0_i32 : i32, i32
  }
}

</mosaic_0001>

<llo_original>
// kernel: tpu_custom_call.1
$region0: #{tpu_custom_call.1}
  #allocation0 [shape = 'u32[]', space=smem, size = 0x4, offset = 0x4, fixed_abs, tag = 'smem constant byte address 0x4 - core index']
  #allocation1 [shape = 'u32[72,128]{1,0:T(1,128)}', space=vmem, size = 0x9000, scoped, tag = 'internal scratch']
  %s0 = inlined_call_operand.vmem [shape: bf16[256,128], index: 0, kind: input, shape index: {}]
  %s1 = inlined_call_operand.vmem [shape: bf16[128,128], index: 1, kind: input, shape index: {}]
  %s2 = inlined_call_operand.vmem [shape: f32[256,1], index: 2, kind: input, shape index: {}]
  %s3 = inlined_call_operand.hbm [shape: bf16[256,128], index: 3, kind: output, shape index: {}]
  %s4 = sld [smem:[#allocation0]]
  $region22: #{tpu_custom_call.1} parent=0
    _
  %s6 = ssub.s32 1, %s4
  %s7 = scalar_select 0, %s6, %s4
  $region1: #{tpu_custom_call.1} parent=0
    #allocation2 [shape = 'u8[65536]{0}', space=vmem, size = 0x10000, scoped, tag = 'output window, operand 0, single buffered']
    #allocation3 [shape = 's32[1]{0}', space=sflag, size = 0x4, scoped, tag = 'scoped memory for tpu_custom_call.1']
    %8 = vsyncpa [#allocation3], 0
    // Predicated region
    $region2: #{tpu_custom_call.1} parent=1 // pred_check
      _
    $region3: #{tpu_custom_call.1} parent=1 // pred_check_branch
      %10 = sbr.rel (0) target = $region5
    $region4: #{tpu_custom_call.1} parent=1 // pred_region
      _
    $region5: #{tpu_custom_call.1} parent=1 // pred_fallthru
      _
    // Predicated region
    $region6: #{tpu_custom_call.1} parent=1 // pred_check
      _
    $region7: #{tpu_custom_call.1} parent=1 // pred_check_branch
      %12 = sbr.rel (0) target = $region9
    $region8: #{tpu_custom_call.1} parent=1 // pred_region
      _
    $region9: #{tpu_custom_call.1} parent=1 // pred_fallthru
      _
    // Predicated region
    $region10: #{tpu_custom_call.1} parent=1 // pred_check
      _
    $region11: #{tpu_custom_call.1} parent=1 // pred_check_branch
      %14 = sbr.rel (0) target = $region13
    $region12: #{tpu_custom_call.1} parent=1 // pred_region
      _
    $region13: #{tpu_custom_call.1} parent=1 // pred_fallthru
      _
    %v15 = vld [vmem:[%s0] sm:$0xf]
    %v16 = vld [vmem:[%s0 + $0x4] sm:$0xf]
    %v17 = vld [vmem:[%s0 + $0x8] sm:$0xf]
    %v18 = vld [vmem:[%s0 + $0xc] sm:$0xf]
    %v19 = vld [vmem:[%s0 + $0x10] sm:$0xf]
    %v20 = vld [vmem:[%s0 + $0x14] sm:$0xf]
    %v21 = vld [vmem:[%s0 + $0x18] sm:$0xf]
    %v22 = vld [vmem:[%s0 + $0x1c] sm:$0xf]
    %v23 = vld [vmem:[%s0 + $0x20] sm:$0xf]
    %v24 = vld [vmem:[%s0 + $0x24] sm:$0xf]
    %v25 = vld [vmem:[%s0 + $0x28] sm:$0xf]
    %v26 = vld [vmem:[%s0 + $0x2c] sm:$0xf]
    %v27 = vld [vmem:[%s0 + $0x30] sm:$0xf]
    %v28 = vld [vmem:[%s0 + $0x34] sm:$0xf]
    %v29 = vld [vmem:[%s0 + $0x38] sm:$0xf]
    %v30 = vld [vmem:[%s0 + $0x3c] sm:$0xf]
    %v31 = vld [vmem:[%s0 + $0x40] sm:$0xf]
    %v32 = vld [vmem:[%s0 + $0x44] sm:$0xf]
    %v33 = vld [vmem:[%s0 + $0x48] sm:$0xf]
    %v34 = vld [vmem:[%s0 + $0x4c] sm:$0xf]
    %v35 = vld [vmem:[%s0 + $0x50] sm:$0xf]
    %v36 = vld [vmem:[%s0 + $0x54] sm:$0xf]
    %v37 = vld [vmem:[%s0 + $0x58] sm:$0xf]
    %v38 = vld [vmem:[%s0 + $0x5c] sm:$0xf]
    %v39 = vld [vmem:[%s0 + $0x60] sm:$0xf]
    %v40 = vld [vmem:[%s0 + $0x64] sm:$0xf]
    %v41 = vld [vmem:[%s0 + $0x68] sm:$0xf]
    %v42 = vld [vmem:[%s0 + $0x6c] sm:$0xf]
    %v43 = vld [vmem:[%s0 + $0x70] sm:$0xf]
    %v44 = vld [vmem:[%s0 + $0x74] sm:$0xf]
    %v45 = vld [vmem:[%s0 + $0x78] sm:$0xf]
    %v46 = vld [vmem:[%s0 + $0x7c] sm:$0xf]
    %v47 = vld [vmem:[%s1] sm:$0xf]
    %v48 = vld [vmem:[%s1 + $0x4] sm:$0xf]
    %v49 = vld [vmem:[%s1 + $0x8] sm:$0xf]
    %v50 = vld [vmem:[%s1 + $0xc] sm:$0xf]
    %v51 = vld [vmem:[%s1 + $0x10] sm:$0xf]
    %v52 = vld [vmem:[%s1 + $0x14] sm:$0xf]
    %v53 = vld [vmem:[%s1 + $0x18] sm:$0xf]
    %v54 = vld [vmem:[%s1 + $0x1c] sm:$0xf]
    %v55 = vld [vmem:[%s1 + $0x20] sm:$0xf]
    %v56 = vld [vmem:[%s1 + $0x24] sm:$0xf]
    %v57 = vld [vmem:[%s1 + $0x28] sm:$0xf]
    %v58 = vld [vmem:[%s1 + $0x2c] sm:$0xf]
    %v59 = vld [vmem:[%s1 + $0x30] sm:$0xf]
    %v60 = vld [vmem:[%s1 + $0x34] sm:$0xf]
    %v61 = vld [vmem:[%s1 + $0x38] sm:$0xf]
    %v62 = vld [vmem:[%s1 + $0x3c] sm:$0xf]
    %v95 = vunpack.c.l.b16 %v15
    %v96 = vunpack.c.l.b16 %v16
    %v97 = vunpack.c.l.b16 %v17
    %v98 = vunpack.c.l.b16 %v18
    %v99 = vunpack.c.l.b16 %v19
    %v100 = vunpack.c.l.b16 %v20
    %v101 = vunpack.c.l.b16 %v21
    %v102 = vunpack.c.l.b16 %v22
    %v103 = vunpack.c.l.b16 %v23
    %v104 = vunpack.c.l.b16 %v24
    %v105 = vunpack.c.l.b16 %v25
    %v106 = vunpack.c.l.b16 %v26
    %v107 = vunpack.c.l.b16 %v27
    %v108 = vunpack.c.l.b16 %v28
    %v109 = vunpack.c.l.b16 %v29
    %v110 = vunpack.c.l.b16 %v30
    %v111 = vunpack.c.l.b16 %v31
    %v112 = vunpack.c.l.b16 %v32
    %v113 = vunpack.c.l.b16 %v33
    %v114 = vunpack.c.l.b16 %v34
    %v115 = vunpack.c.l.b16 %v35
    %v116 = vunpack.c.l.b16 %v36
    %v117 = vunpack.c.l.b16 %v37
    %v118 = vunpack.c.l.b16 %v38
    %v119 = vunpack.c.l.b16 %v39
    %v120 = vunpack.c.l.b16 %v40
    %v121 = vunpack.c.l.b16 %v41
    %v122 = vunpack.c.l.b16 %v42
    %v123 = vunpack.c.l.b16 %v43
    %v124 = vunpack.c.l.b16 %v44
    %v125 = vunpack.c.l.b16 %v45
    %v126 = vunpack.c.l.b16 %v46
    %v127 = vpack.c.b16 %v96, %v95
    %v128 = vpack.c.b16 %v98, %v97
    %v129 = vpack.c.b16 %v100, %v99
    %v130 = vpack.c.b16 %v102, %v101
    %v131 = vpack.c.b16 %v104, %v103
    %v132 = vpack.c.b16 %v106, %v105
    %v133 = vpack.c.b16 %v108, %v107
    %v134 = vpack.c.b16 %v110, %v109
    %v135 = vpack.c.b16 %v112, %v111
    %v136 = vpack.c.b16 %v114, %v113
    %v137 = vpack.c.b16 %v116, %v115
    %v138 = vpack.c.b16 %v118, %v117
    %v139 = vpack.c.b16 %v120, %v119
    %v140 = vpack.c.b16 %v122, %v121
    %v141 = vpack.c.b16 %v124, %v123
    %v142 = vpack.c.b16 %v126, %v125
    %v175 = vunpack.c.l.b16 %v47
    %v176 = vunpack.c.l.b16 %v48
    %v177 = vunpack.c.l.b16 %v49
    %v178 = vunpack.c.l.b16 %v50
    %v179 = vunpack.c.l.b16 %v51
    %v180 = vunpack.c.l.b16 %v52
    %v181 = vunpack.c.l.b16 %v53
    %v182 = vunpack.c.l.b16 %v54
    %v183 = vunpack.c.l.b16 %v55
    %v184 = vunpack.c.l.b16 %v56
    %v185 = vunpack.c.l.b16 %v57
    %v186 = vunpack.c.l.b16 %v58
    %v187 = vunpack.c.l.b16 %v59
    %v188 = vunpack.c.l.b16 %v60
    %v189 = vunpack.c.l.b16 %v61
    %v190 = vunpack.c.l.b16 %v62
    %v191 = vpack.c.b16 %v176, %v175
    %v192 = vpack.c.b16 %v178, %v177
    %v193 = vpack.c.b16 %v180, %v179
    %v194 = vpack.c.b16 %v182, %v181
    %v195 = vpack.c.b16 %v184, %v183
    %v196 = vpack.c.b16 %v186, %v185
    %v197 = vpack.c.b16 %v188, %v187
    %v198 = vpack.c.b16 %v190, %v189
    %207 = vmatpush.bf16.msra.mxu0 %v198
    %208 = vmatpush.bf16.msra.mxu0 %v197
    %209 = vmatpush.bf16.msra.mxu0 %v196
    %210 = vmatpush.bf16.msra.mxu0 %v195
    %211 = vmatpush.bf16.msra.mxu0 %v194
    %212 = vmatpush.bf16.msra.mxu0 %v193
    %213 = vmatpush.bf16.msra.mxu0 %v192
    %214 = vmatpush.bf16.msra.mxu0 %v191
    %215 = vmatmul.bf16.gmra.mxu0 %v127
    %v216 = vpop.f32.mrf.mxu0
    %v217 = vadd.f32 0.0, %v216
    %v218 = vpop.f32.mrf.mxu0
    %v219 = vadd.f32 0.0, %v218
    %220 = vmatmul.bf16.gmra.mxu0 %v128
    %v221 = vpop.f32.mrf.mxu0
    %v222 = vadd.f32 0.0, %v221
    %v223 = vpop.f32.mrf.mxu0
    %v224 = vadd.f32 0.0, %v223
    %225 = vmatmul.bf16.gmra.mxu0 %v129
    %v226 = vpop.f32.mrf.mxu0
    %v227 = vadd.f32 0.0, %v226
    %v228 = vpop.f32.mrf.mxu0
    %v229 = vadd.f32 0.0, %v228
    %230 = vmatmul.bf16.gmra.mxu0 %v130
    %v231 = vpop.f32.mrf.mxu0
    %v232 = vadd.f32 0.0, %v231
    %v233 = vpop.f32.mrf.mxu0
    %v234 = vadd.f32 0.0, %v233
    %235 = vmatmul.bf16.gmra.mxu0 %v131
    %v236 = vpop.f32.mrf.mxu0
    %v237 = vadd.f32 0.0, %v236
    %v238 = vpop.f32.mrf.mxu0
    %v239 = vadd.f32 0.0, %v238
    %240 = vmatmul.bf16.gmra.mxu0 %v132
    %v241 = vpop.f32.mrf.mxu0
    %v242 = vadd.f32 0.0, %v241
    %v243 = vpop.f32.mrf.mxu0
    %v244 = vadd.f32 0.0, %v243
    %245 = vmatmul.bf16.gmra.mxu0 %v133
    %v246 = vpop.f32.mrf.mxu0
    %v247 = vadd.f32 0.0, %v246
    %v248 = vpop.f32.mrf.mxu0
    %v249 = vadd.f32 0.0, %v248
    %250 = vmatmul.bf16.gmra.mxu0 %v134
    %v251 = vpop.f32.mrf.mxu0
    %v252 = vadd.f32 0.0, %v251
    %v253 = vpop.f32.mrf.mxu0
    %v254 = vadd.f32 0.0, %v253
    %255 = vmatmul.bf16.gmra.mxu0 %v135
    %v256 = vpop.f32.mrf.mxu0
    %v257 = vadd.f32 0.0, %v256
    %v258 = vpop.f32.mrf.mxu0
    %v259 = vadd.f32 0.0, %v258
    %260 = vmatmul.bf16.gmra.mxu0 %v136
    %v261 = vpop.f32.mrf.mxu0
    %v262 = vadd.f32 0.0, %v261
    %v263 = vpop.f32.mrf.mxu0
    %v264 = vadd.f32 0.0, %v263
    %265 = vmatmul.bf16.gmra.mxu0 %v137
    %v266 = vpop.f32.mrf.mxu0
    %v267 = vadd.f32 0.0, %v266
    %v268 = vpop.f32.mrf.mxu0
    %v269 = vadd.f32 0.0, %v268
    %270 = vmatmul.bf16.gmra.mxu0 %v138
    %v271 = vpop.f32.mrf.mxu0
    %v272 = vadd.f32 0.0, %v271
    %v273 = vpop.f32.mrf.mxu0
    %v274 = vadd.f32 0.0, %v273
    %275 = vmatmul.bf16.gmra.mxu0 %v139
    %v276 = vpop.f32.mrf.mxu0
    %v277 = vadd.f32 0.0, %v276
    %v278 = vpop.f32.mrf.mxu0
    %v279 = vadd.f32 0.0, %v278
    %280 = vmatmul.bf16.gmra.mxu0 %v140
    %v281 = vpop.f32.mrf.mxu0
    %v282 = vadd.f32 0.0, %v281
    %v283 = vpop.f32.mrf.mxu0
    %v284 = vadd.f32 0.0, %v283
    %285 = vmatmul.bf16.gmra.mxu0 %v141
    %v286 = vpop.f32.mrf.mxu0
    %v287 = vadd.f32 0.0, %v286
    %v288 = vpop.f32.mrf.mxu0
    %v289 = vadd.f32 0.0, %v288
    %290 = vmatmul.bf16.gmra.mxu0 %v142
    %v291 = vpop.f32.mrf.mxu0
    %v292 = vadd.f32 0.0, %v291
    %v293 = vpop.f32.mrf.mxu0
    %v294 = vadd.f32 0.0, %v293
    %295 = vdwg.mxu0
    %v296 = vld [vmem:[%s2] sm:$0xff]
    %v297 = vld [vmem:[%s2 + $0x8] sm:$0xff]
    %v298 = vld [vmem:[%s2 + $0x10] sm:$0xff]
    %v299 = vld [vmem:[%s2 + $0x18] sm:$0xff]
    %v300 = vld [vmem:[%s2 + $0x20] sm:$0xff]
    %v301 = vld [vmem:[%s2 + $0x28] sm:$0xff]
    %v302 = vld [vmem:[%s2 + $0x30] sm:$0xff]
    %v303 = vld [vmem:[%s2 + $0x38] sm:$0xff]
    %v304 = vld [vmem:[%s2 + $0x40] sm:$0xff]
    %v305 = vld [vmem:[%s2 + $0x48] sm:$0xff]
    %v306 = vld [vmem:[%s2 + $0x50] sm:$0xff]
    %v307 = vld [vmem:[%s2 + $0x58] sm:$0xff]
    %v308 = vld [vmem:[%s2 + $0x60] sm:$0xff]
    %v309 = vld [vmem:[%s2 + $0x68] sm:$0xff]
    %v310 = vld [vmem:[%s2 + $0x70] sm:$0xff]
    %v311 = vld [vmem:[%s2 + $0x78] sm:$0xff]
    %v312 = vld [vmem:[%s2 + $0x80] sm:$0xff]
    %v313 = vld [vmem:[%s2 + $0x88] sm:$0xff]
    %v314 = vld [vmem:[%s2 + $0x90] sm:$0xff]
    %v315 = vld [vmem:[%s2 + $0x98] sm:$0xff]
    %v316 = vld [vmem:[%s2 + $0xa0] sm:$0xff]
    %v317 = vld [vmem:[%s2 + $0xa8] sm:$0xff]
    %v318 = vld [vmem:[%s2 + $0xb0] sm:$0xff]
    %v319 = vld [vmem:[%s2 + $0xb8] sm:$0xff]
    %v320 = vld [vmem:[%s2 + $0xc0] sm:$0xff]
    %v321 = vld [vmem:[%s2 + $0xc8] sm:$0xff]
    %v322 = vld [vmem:[%s2 + $0xd0] sm:$0xff]
    %v323 = vld [vmem:[%s2 + $0xd8] sm:$0xff]
    %v324 = vld [vmem:[%s2 + $0xe0] sm:$0xff]
    %v325 = vld [vmem:[%s2 + $0xe8] sm:$0xff]
    %v326 = vld [vmem:[%s2 + $0xf0] sm:$0xff]
    %v327 = vld [vmem:[%s2 + $0xf8] sm:$0xff]
    %329 = vset.pattern.permute.xlu0 0
    %330 = vperm.xlu0 %329, %v296
    %v331 = vpop.permute.xlu0 %330
    %334 = vset.pattern.permute.xlu0 0
    %335 = vperm.xlu0 %334, %v297
    %v336 = vpop.permute.xlu0 %335
    %339 = vset.pattern.permute.xlu0 0
    %340 = vperm.xlu0 %339, %v298
    %v341 = vpop.permute.xlu0 %340
    %344 = vset.pattern.permute.xlu0 0
    %345 = vperm.xlu0 %344, %v299
    %v346 = vpop.permute.xlu0 %345
    %349 = vset.pattern.permute.xlu0 0
    %350 = vperm.xlu0 %349, %v300
    %v351 = vpop.permute.xlu0 %350
    %354 = vset.pattern.permute.xlu0 0
    %355 = vperm.xlu0 %354, %v301
    %v356 = vpop.permute.xlu0 %355
    %359 = vset.pattern.permute.xlu0 0
    %360 = vperm.xlu0 %359, %v302
    %v361 = vpop.permute.xlu0 %360
    %364 = vset.pattern.permute.xlu0 0
    %365 = vperm.xlu0 %364, %v303
    %v366 = vpop.permute.xlu0 %365
    %369 = vset.pattern.permute.xlu0 0
    %370 = vperm.xlu0 %369, %v304
    %v371 = vpop.permute.xlu0 %370
    %374 = vset.pattern.permute.xlu0 0
    %375 = vperm.xlu0 %374, %v305
    %v376 = vpop.permute.xlu0 %375
    %379 = vset.pattern.permute.xlu0 0
    %380 = vperm.xlu0 %379, %v306
    %v381 = vpop.permute.xlu0 %380
    %384 = vset.pattern.permute.xlu0 0
    %385 = vperm.xlu0 %384, %v307
    %v386 = vpop.permute.xlu0 %385
    %389 = vset.pattern.permute.xlu0 0
    %390 = vperm.xlu0 %389, %v308
    %v391 = vpop.permute.xlu0 %390
    %394 = vset.pattern.permute.xlu0 0
    %395 = vperm.xlu0 %394, %v309
    %v396 = vpop.permute.xlu0 %395
    %399 = vset.pattern.permute.xlu0 0
    %400 = vperm.xlu0 %399, %v310
    %v401 = vpop.permute.xlu0 %400
    %404 = vset.pattern.permute.xlu0 0
    %405 = vperm.xlu0 %404, %v311
    %v406 = vpop.permute.xlu0 %405
    %409 = vset.pattern.permute.xlu0 0
    %410 = vperm.xlu0 %409, %v312
    %v411 = vpop.permute.xlu0 %410
    %414 = vset.pattern.permute.xlu0 0
    %415 = vperm.xlu0 %414, %v313
    %v416 = vpop.permute.xlu0 %415
    %419 = vset.pattern.permute.xlu0 0
    %420 = vperm.xlu0 %419, %v314
    %v421 = vpop.permute.xlu0 %420
    %424 = vset.pattern.permute.xlu0 0
    %425 = vperm.xlu0 %424, %v315
    %v426 = vpop.permute.xlu0 %425
    %429 = vset.pattern.permute.xlu0 0
    %430 = vperm.xlu0 %429, %v316
    %v431 = vpop.permute.xlu0 %430
    %434 = vset.pattern.permute.xlu0 0
    %435 = vperm.xlu0 %434, %v317
    %v436 = vpop.permute.xlu0 %435
    %439 = vset.pattern.permute.xlu0 0
    %440 = vperm.xlu0 %439, %v318
    %v441 = vpop.permute.xlu0 %440
    %444 = vset.pattern.permute.xlu0 0
    %445 = vperm.xlu0 %444, %v319
    %v446 = vpop.permute.xlu0 %445
    %449 = vset.pattern.permute.xlu0 0
    %450 = vperm.xlu0 %449, %v320
    %v451 = vpop.permute.xlu0 %450
    %454 = vset.pattern.permute.xlu0 0
    %455 = vperm.xlu0 %454, %v321
    %v456 = vpop.permute.xlu0 %455
    %459 = vset.pattern.permute.xlu0 0
    %460 = vperm.xlu0 %459, %v322
    %v461 = vpop.permute.xlu0 %460
    %464 = vset.pattern.permute.xlu0 0
    %465 = vperm.xlu0 %464, %v323
    %v466 = vpop.permute.xlu0 %465
    %469 = vset.pattern.permute.xlu0 0
    %470 = vperm.xlu0 %469, %v324
    %v471 = vpop.permute.xlu0 %470
    %474 = vset.pattern.permute.xlu0 0
    %475 = vperm.xlu0 %474, %v325
    %v476 = vpop.permute.xlu0 %475
    %479 = vset.pattern.permute.xlu0 0
    %480 = vperm.xlu0 %479, %v326
    %v481 = vpop.permute.xlu0 %480
    %484 = vset.pattern.permute.xlu0 0
    %485 = vperm.xlu0 %484, %v327
    %v486 = vpop.permute.xlu0 %485
    %v488 = vmul.f32 %v217, %v331
    %v489 = vmul.f32 %v219, %v336
    %v490 = vmul.f32 %v222, %v341
    %v491 = vmul.f32 %v224, %v346
    %v492 = vmul.f32 %v227, %v351
    %v493 = vmul.f32 %v229, %v356
    %v494 = vmul.f32 %v232, %v361
    %v495 = vmul.f32 %v234, %v366
    %v496 = vmul.f32 %v237, %v371
    %v497 = vmul.f32 %v239, %v376
    %v498 = vmul.f32 %v242, %v381
    %v499 = vmul.f32 %v244, %v386
    %v500 = vmul.f32 %v247, %v391
    %v501 = vmul.f32 %v249, %v396
    %v502 = vmul.f32 %v252, %v401
    %v503 = vmul.f32 %v254, %v406
    %v504 = vmul.f32 %v257, %v411
    %v505 = vmul.f32 %v259, %v416
    %v506 = vmul.f32 %v262, %v421
    %v507 = vmul.f32 %v264, %v426
    %v508 = vmul.f32 %v267, %v431
    %v509 = vmul.f32 %v269, %v436
    %v510 = vmul.f32 %v272, %v441
    %v511 = vmul.f32 %v274, %v446
    %v512 = vmul.f32 %v277, %v451
    %v513 = vmul.f32 %v279, %v456
    %v514 = vmul.f32 %v282, %v461
    %v515 = vmul.f32 %v284, %v466
    %v516 = vmul.f32 %v287, %v471
    %v517 = vmul.f32 %v289, %v476
    %v518 = vmul.f32 %v292, %v481
    %v519 = vmul.f32 %v294, %v486
    %v520 = vpack.c.bf16 %v488, %v488
    %v521 = vpack.c.bf16 %v489, %v489
    %v522 = vpack.c.bf16 %v490, %v490
    %v523 = vpack.c.bf16 %v491, %v491
    %v524 = vpack.c.bf16 %v492, %v492
    %v525 = vpack.c.bf16 %v493, %v493
    %v526 = vpack.c.bf16 %v494, %v494
    %v527 = vpack.c.bf16 %v495, %v495
    %v528 = vpack.c.bf16 %v496, %v496
    %v529 = vpack.c.bf16 %v497, %v497
    %v530 = vpack.c.bf16 %v498, %v498
    %v531 = vpack.c.bf16 %v499, %v499
    %v532 = vpack.c.bf16 %v500, %v500
    %v533 = vpack.c.bf16 %v501, %v501
    %v534 = vpack.c.bf16 %v502, %v502
    %v535 = vpack.c.bf16 %v503, %v503
    %v536 = vpack.c.bf16 %v504, %v504
    %v537 = vpack.c.bf16 %v505, %v505
    %v538 = vpack.c.bf16 %v506, %v506
    %v539 = vpack.c.bf16 %v507, %v507
    %v540 = vpack.c.bf16 %v508, %v508
    %v541 = vpack.c.bf16 %v509, %v509
    %v542 = vpack.c.bf16 %v510, %v510
    %v543 = vpack.c.bf16 %v511, %v511
    %v544 = vpack.c.bf16 %v512, %v512
    %v545 = vpack.c.bf16 %v513, %v513
    %v546 = vpack.c.bf16 %v514, %v514
    %v547 = vpack.c.bf16 %v515, %v515
    %v548 = vpack.c.bf16 %v516, %v516
    %v549 = vpack.c.bf16 %v517, %v517
    %v550 = vpack.c.bf16 %v518, %v518
    %v551 = vpack.c.bf16 %v519, %v519
    %552 = vst [vmem:[#allocation2] sm:$0xf] %v520
    %553 = vst [vmem:[#allocation2 + $0x4] sm:$0xf] %v521
    %554 = vst [vmem:[#allocation2 + $0x8] sm:$0xf] %v522
    %555 = vst [vmem:[#allocation2 + $0xc] sm:$0xf] %v523
    %556 = vst [vmem:[#allocation2 + $0x10] sm:$0xf] %v524
    %557 = vst [vmem:[#allocation2 + $0x14] sm:$0xf] %v525
    %558 = vst [vmem:[#allocation2 + $0x18] sm:$0xf] %v526
    %559 = vst [vmem:[#allocation2 + $0x1c] sm:$0xf] %v527
    %560 = vst [vmem:[#allocation2 + $0x20] sm:$0xf] %v528
    %561 = vst [vmem:[#allocation2 + $0x24] sm:$0xf] %v529
    %562 = vst [vmem:[#allocation2 + $0x28] sm:$0xf] %v530
    %563 = vst [vmem:[#allocation2 + $0x2c] sm:$0xf] %v531
    %564 = vst [vmem:[#allocation2 + $0x30] sm:$0xf] %v532
    %565 = vst [vmem:[#allocation2 + $0x34] sm:$0xf] %v533
    %566 = vst [vmem:[#allocation2 + $0x38] sm:$0xf] %v534
    %567 = vst [vmem:[#allocation2 + $0x3c] sm:$0xf] %v535
    %568 = vst [vmem:[#allocation2 + $0x40] sm:$0xf] %v536
    %569 = vst [vmem:[#allocation2 + $0x44] sm:$0xf] %v537
    %570 = vst [vmem:[#allocation2 + $0x48] sm:$0xf] %v538
    %571 = vst [vmem:[#allocation2 + $0x4c] sm:$0xf] %v539
    %572 = vst [vmem:[#allocation2 + $0x50] sm:$0xf] %v540
    %573 = vst [vmem:[#allocation2 + $0x54] sm:$0xf] %v541
    %574 = vst [vmem:[#allocation2 + $0x58] sm:$0xf] %v542
    %575 = vst [vmem:[#allocation2 + $0x5c] sm:$0xf] %v543
    %576 = vst [vmem:[#allocation2 + $0x60] sm:$0xf] %v544
    %577 = vst [vmem:[#allocation2 + $0x64] sm:$0xf] %v545
    %578 = vst [vmem:[#allocation2 + $0x68] sm:$0xf] %v546
    %579 = vst [vmem:[#allocation2 + $0x6c] sm:$0xf] %v547
    %580 = vst [vmem:[#allocation2 + $0x70] sm:$0xf] %v548
    %581 = vst [vmem:[#allocation2 + $0x74] sm:$0xf] %v549
    %582 = vst [vmem:[#allocation2 + $0x78] sm:$0xf] %v550
    %583 = vst [vmem:[#allocation2 + $0x7c] sm:$0xf] %v551
    // Predicated region
    $region14: #{tpu_custom_call.1} parent=1 // pred_check
      _
    $region15: #{tpu_custom_call.1} parent=1 // pred_check_branch
      %585 = sbr.rel (0) target = $region17
    $region16: #{tpu_custom_call.1} parent=1 // pred_region
      %587 = vsyncadd [#allocation3], 0
      %s588 = sshll.u32 [#allocation2], 4
      %s589 = int_to_ptr.vmem [resolvable:$true] %s588
      %s590 = sshll.u32 %s3, 4
      %s591 = int_to_ptr.hbm [resolvable:$true] %s590
      %596 = dma.vmem_to_hbm [thread:$0]  %s589, 2048, %s591, [#allocation3], 64, 64, 4
    $region17: #{tpu_custom_call.1} parent=1 // pred_fallthru
      _
    // Predicated region
    $region18: #{tpu_custom_call.1} parent=1 // pred_check
      _
    $region19: #{tpu_custom_call.1} parent=1 // pred_check_branch
      %598 = sbr.rel (0) target = $region21
    $region20: #{tpu_custom_call.1} parent=1 // pred_region
      %600 = dma.done [#allocation3], 2048
    $region21: #{tpu_custom_call.1} parent=1 // pred_fallthru
      _
    %601 = vsyncpa [#allocation3], 1

</llo_original>
